<compile_context>
chip_gen: v6e
topology: v6e:2x2x1
jax: 0.10.0
libtpu: 0.0.40
codegen_flags: <defaults>
</compile_context>

<pallas_src>
import jax
import jax.numpy as jnp
from jax.experimental import pallas as pl
from jax.experimental.pallas import tpu as pltpu


def _wce_group2_partial_kernel(x_ref, t_ref, o_ref):
    x = x_ref[...].astype(jnp.float32)
    t = t_ref[...].astype(jnp.float32)
    # middle = input * 2 * (0.5 - target) + target
    middle = x * 2.0 * (0.5 - t) + t                      # (BR, L)
    br, lanes = middle.shape                              # static ints
    # Split the leading (row) axis only -- layout-preserving -- then reduce the
    # resulting "tile row" axis with plain VPU adds.  Result stays lane-dense.
    o_ref[...] = jnp.sum(middle.reshape(br // 8, 8, lanes), axis=0)   # (8, L)


def myloss_wce_group2(input_arr, target_arr, *, lanes=512, max_block_rows=2048):
    """Pallas equivalent of MyLossx.forward(input, target) -> scalar mean."""
    N = target_arr.shape[0]
    total = int(input_arr.size)
    assert int(target_arr.size) == total, "input/target must have the same size"
    assert total > 0 and N > 0

    L = int(lanes)                      # lane width, multiple of 128
    rows = -(-total // L)               # ceil(total / L)
    # Row-block: multiple of 8 (sublane), capped for VMEM (BR*L*4B <= 4 MiB).
    BR = min(int(max_block_rows), ((rows + 7) // 8) * 8)
    rows_pad = ((rows + BR - 1) // BR) * BR
    padded = rows_pad * L
    num_blocks = rows_pad // BR

    x1 = input_arr.reshape(-1)
    t1 = target_arr.reshape(-1)
    if padded != total:
        # Zero padding contributes exactly 0 to the sum (0*2*(0.5-0)+0 == 0).
        x1 = jnp.pad(x1, (0, padded - total))
        t1 = jnp.pad(t1, (0, padded - total))
    x2 = x1.reshape(rows_pad, L)
    t2 = t1.reshape(rows_pad, L)

    partials = pl.pallas_call(
        _wce_group2_partial_kernel,
        out_shape=jax.ShapeDtypeStruct((num_blocks * 8, L), jnp.float32),
        grid_spec=pltpu.PrefetchScalarGridSpec(
            num_scalar_prefetch=0,
            grid=(num_blocks,),
            in_specs=[
                pl.BlockSpec((BR, L), lambda i: (i, 0)),
                pl.BlockSpec((BR, L), lambda i: (i, 0)),
            ],
            out_specs=pl.BlockSpec((8, L), lambda i: (i, 0)),
        ),
        compiler_params=pltpu.CompilerParams(
            # Independent per-block partials -> shardable across TensorCores (v7x).
            dimension_semantics=("parallel",),
            # Explicit scoped VMEM: fits 2 inputs x 2 buffers x 4 MiB comfortably
            # and stays within v7x's 64 MiB physical VMEM.
            vmem_limit_bytes=48 * 1024 * 1024,
        ),
    )(x2, t2)

    # Tiny final reduction of the (num_blocks*8, L) partials, then the mean scale.
    return jnp.sum(partials) * (1.0 / float(total))


def myloss_wce_group2_ref(input_arr, target_arr):
    N = target_arr.shape[0]
    x = input_arr.reshape(N, -1).astype(jnp.float32)
    t = target_arr.reshape(N, -1).astype(jnp.float32)
    return jnp.mean(x * 2.0 * (0.5 - t) + t)


if __name__ == "__main__":
    key = jax.random.PRNGKey(0)
    k1, k2 = jax.random.split(key)
    # Small NCHW-like shapes consistent with a segmentation loss: (N, C, H, W)
    x = jax.random.uniform(k1, (2, 4, 16, 16), dtype=jnp.float32)           # predictions
    t = (jax.random.uniform(k2, (2, 4, 16, 16)) > 0.5).astype(jnp.float32)  # binary targets

    loss = myloss_wce_group2(x, t)
    jax.block_until_ready(loss)

    ref = myloss_wce_group2_ref(x, t)
    assert jnp.allclose(loss, ref, atol=1e-5, rtol=1e-5), (loss, ref)
    print("KERNEL_OK")
</pallas_src>

<mosaic_0001>
module attributes {stable_mosaic.version = 11 : i64} {
  func.func @_wce_group2_partial_kernel(%arg0: i32, %arg1: memref<8x512xf32, #tpu.memory_space<vmem>>, %arg2: memref<8x512xf32, #tpu.memory_space<vmem>>, %arg3: memref<8x512xf32, #tpu.memory_space<vmem>>) attributes {dimension_semantics = [#tpu.dimension_semantics<parallel>], iteration_bounds = array<i64: 1>, scalar_prefetch = 0 : i64, scratch_operands = 0 : i64, tpu.core_type = #tpu.core_type<tc>, window_params = [{transform_indices = @transform_0, window_bounds = array<i64: 8, 512>}, {transform_indices = @transform_1, window_bounds = array<i64: 8, 512>}, {transform_indices = @transform_2, window_bounds = array<i64: 8, 512>}]} {
    %c0 = arith.constant 0 : index
    %c0_0 = arith.constant 0 : index
    %0 = vector.load %arg1[%c0, %c0_0] : memref<8x512xf32, #tpu.memory_space<vmem>>, vector<8x512xf32>
    %c0_1 = arith.constant 0 : index
    %c0_2 = arith.constant 0 : index
    %1 = vector.load %arg2[%c0_1, %c0_2] : memref<8x512xf32, #tpu.memory_space<vmem>>, vector<8x512xf32>
    %cst = arith.constant 2.000000e+00 : f32
    %2 = vector.broadcast %cst : f32 to vector<8x512xf32>
    %3 = arith.mulf %0, %2 : vector<8x512xf32>
    %cst_3 = arith.constant 5.000000e-01 : f32
    %4 = vector.broadcast %cst_3 : f32 to vector<8x512xf32>
    %5 = arith.subf %4, %1 : vector<8x512xf32>
    %6 = arith.mulf %3, %5 : vector<8x512xf32>
    %7 = arith.addf %6, %1 : vector<8x512xf32>
    %8 = vector.shape_cast %7 : vector<8x512xf32> to vector<1x8x512xf32>
    %cst_4 = arith.constant dense<0.000000e+00> : vector<8x512xf32>
    %9 = vector.multi_reduction <add>, %8, %cst_4 [0] : vector<1x8x512xf32> to vector<8x512xf32>
    %c0_5 = arith.constant 0 : index
    %c0_6 = arith.constant 0 : index
    %10 = vector.load %arg3[%c0_5, %c0_6] : memref<8x512xf32, #tpu.memory_space<vmem>>, vector<8x512xf32>
    tpu.vector_store %arg3[%c0_5, %c0_6], %9 {strides = array<i32>} : memref<8x512xf32, #tpu.memory_space<vmem>>, vector<8x512xf32>,
    return
  }
  func.func @transform_0(%arg0: i32) -> (i32, i32) {
    %c0_i32 = arith.constant 0 : i32
    %c0_i32_0 = arith.constant 0 : i32
    return %arg0, %c0_i32 : i32, i32
  }
  func.func @transform_1(%arg0: i32) -> (i32, i32) {
    %c0_i32 = arith.constant 0 : i32
    %c0_i32_0 = arith.constant 0 : i32
    return %arg0, %c0_i32 : i32, i32
  }
  func.func @transform_2(%arg0: i32) -> (i32, i32) {
    %c0_i32 = arith.constant 0 : i32
    %c0_i32_0 = arith.constant 0 : i32
    return %arg0, %c0_i32 : i32, i32
  }
}

</mosaic_0001>

<llo_original>
// kernel: tpu_custom_call.1
$region0: #{tpu_custom_call.1}
  #allocation0 [shape = 'u32[]', space=smem, size = 0x4, offset = 0x4, fixed_abs, tag = 'smem constant byte address 0x4 - core index']
  #allocation1 [shape = 'u32[144,128]{1,0:T(1,128)}', space=vmem, size = 0x12000, scoped, tag = 'internal scratch']
  %s0 = inlined_call_operand.hbm [shape: f32[8,512], index: 0, kind: input, shape index: {}]
  %s1 = inlined_call_operand.hbm [shape: f32[8,512], index: 1, kind: input, shape index: {}]
  %s2 = inlined_call_operand.hbm [shape: f32[8,512], index: 2, kind: output, shape index: {}]
  %s3 = sld [smem:[#allocation0]]
  $region26: #{tpu_custom_call.1} parent=0
    _
  %s5 = ssub.s32 1, %s3
  %s6 = scalar_select 0, %s5, %s3
  $region1: #{tpu_custom_call.1} parent=0
    #allocation2 [shape = 'u8[16384]{0}', space=vmem, size = 0x4000, scoped, tag = 'input window, operand 0, single buffered']
    #allocation3 [shape = 's32[1]{0}', space=sflag, size = 0x4, scoped, tag = 'scoped memory for tpu_custom_call.1']
    #allocation4 [shape = 's32[1]{0}', space=sflag, size = 0x4, scoped, tag = 'scoped memory for tpu_custom_call.1']
    #allocation5 [shape = 'u8[16384]{0}', space=vmem, size = 0x4000, scoped, tag = 'input window, operand 1, single buffered']
    #allocation6 [shape = 's32[1]{0}', space=sflag, size = 0x4, scoped, tag = 'scoped memory for tpu_custom_call.1']
    #allocation7 [shape = 'u8[16384]{0}', space=vmem, size = 0x4000, scoped, tag = 'output window, operand 0, single buffered']
    %7 = vsyncpa [#allocation3], 0
    %8 = vsyncpa [#allocation6], 0
    %9 = vsyncpa [#allocation4], 0
    // Predicated region
    $region2: #{tpu_custom_call.1} parent=1 // pred_check
      _
    $region3: #{tpu_custom_call.1} parent=1 // pred_check_branch
      %11 = sbr.rel (0) target = $region5
    $region4: #{tpu_custom_call.1} parent=1 // pred_region
      %s13 = ssub.s32 512, 512
      %14 = vsyncadd [#allocation3], %s13
      %s16 = sshll.u32 [#allocation2], 4
      %s17 = int_to_ptr.vmem [resolvable:$true] %s16
      %19 = dma.hbm_to_vmem [thread:$0]  %s0, 512, %s17, [#allocation3]
    $region5: #{tpu_custom_call.1} parent=1 // pred_fallthru
      _
    // Predicated region
    $region6: #{tpu_custom_call.1} parent=1 // pred_check
      _
    $region7: #{tpu_custom_call.1} parent=1 // pred_check_branch
      %21 = sbr.rel (0) target = $region9
    $region8: #{tpu_custom_call.1} parent=1 // pred_region
      %s23 = ssub.s32 512, 512
      %24 = vsyncadd [#allocation6], %s23
      %s26 = sshll.u32 [#allocation5], 4
      %s27 = int_to_ptr.vmem [resolvable:$true] %s26
      %29 = dma.hbm_to_vmem [thread:$0]  %s1, 512, %s27, [#allocation6]
    $region9: #{tpu_custom_call.1} parent=1 // pred_fallthru
      _
    // Predicated region
    $region10: #{tpu_custom_call.1} parent=1 // pred_check
      _
    $region11: #{tpu_custom_call.1} parent=1 // pred_check_branch
      %31 = sbr.rel (0) target = $region13
    $region12: #{tpu_custom_call.1} parent=1 // pred_region
      %32 = dma.done [#allocation3], 512
    $region13: #{tpu_custom_call.1} parent=1 // pred_fallthru
      _
    // Predicated region
    $region14: #{tpu_custom_call.1} parent=1 // pred_check
      _
    $region15: #{tpu_custom_call.1} parent=1 // pred_check_branch
      %34 = sbr.rel (0) target = $region17
    $region16: #{tpu_custom_call.1} parent=1 // pred_region
      %35 = dma.done [#allocation6], 512
    $region17: #{tpu_custom_call.1} parent=1 // pred_fallthru
      _
    %v36 = vld [vmem:[#allocation2] sm:$0xff]
    %v37 = vld [vmem:[#allocation2 + $0x8] sm:$0xff]
    %v38 = vld [vmem:[#allocation2 + $0x10] sm:$0xff]
    %v39 = vld [vmem:[#allocation2 + $0x18] sm:$0xff]
    %v40 = vld [vmem:[#allocation5] sm:$0xff]
    %v41 = vld [vmem:[#allocation5 + $0x8] sm:$0xff]
    %v42 = vld [vmem:[#allocation5 + $0x10] sm:$0xff]
    %v43 = vld [vmem:[#allocation5 + $0x18] sm:$0xff]
    %v44 = vmul.f32 %v36, 2.0
    %v45 = vmul.f32 %v37, 2.0
    %v46 = vmul.f32 %v38, 2.0
    %v47 = vmul.f32 %v39, 2.0
    %v48 = vsub.f32 0.5, %v40
    %v49 = vsub.f32 0.5, %v41
    %v50 = vsub.f32 0.5, %v42
    %v51 = vsub.f32 0.5, %v43
    %v52 = vmul.f32 %v44, %v48
    %v53 = vmul.f32 %v45, %v49
    %v54 = vmul.f32 %v46, %v50
    %v55 = vmul.f32 %v47, %v51
    %v56 = vadd.f32 %v52, %v40
    %v57 = vadd.f32 %v53, %v41
    %v58 = vadd.f32 %v54, %v42
    %v59 = vadd.f32 %v55, %v43
    %v60 = vadd.f32 %v56, 0.0
    %v61 = vadd.f32 %v57, 0.0
    %v62 = vadd.f32 %v58, 0.0
    %v63 = vadd.f32 %v59, 0.0
    %64 = vst [vmem:[#allocation7] sm:$0xff] %v60
    %65 = vst [vmem:[#allocation7 + $0x8] sm:$0xff] %v61
    %66 = vst [vmem:[#allocation7 + $0x10] sm:$0xff] %v62
    %67 = vst [vmem:[#allocation7 + $0x18] sm:$0xff] %v63
    // Predicated region
    $region18: #{tpu_custom_call.1} parent=1 // pred_check
      _
    $region19: #{tpu_custom_call.1} parent=1 // pred_check_branch
      %69 = sbr.rel (0) target = $region21
    $region20: #{tpu_custom_call.1} parent=1 // pred_region
      %s71 = ssub.s32 512, 512
      %72 = vsyncadd [#allocation4], %s71
      %s74 = sshll.u32 [#allocation7], 4
      %s75 = int_to_ptr.vmem [resolvable:$true] %s74
      %77 = dma.vmem_to_hbm [thread:$0]  %s75, 512, %s2, [#allocation4]
    $region21: #{tpu_custom_call.1} parent=1 // pred_fallthru
      _
    // Predicated region
    $region22: #{tpu_custom_call.1} parent=1 // pred_check
      _
    $region23: #{tpu_custom_call.1} parent=1 // pred_check_branch
      %79 = sbr.rel (0) target = $region25
    $region24: #{tpu_custom_call.1} parent=1 // pred_region
      %80 = dma.done [#allocation4], 512
    $region25: #{tpu_custom_call.1} parent=1 // pred_fallthru
      _
    %81 = vsyncpa [#allocation3], 1
    %82 = vsyncpa [#allocation6], 1
    %83 = vsyncpa [#allocation4], 1

</llo_original>
